<compile_context>
chip_gen: v7x
topology: tpu7x:2x2x1
jax: 0.10.0
libtpu: 0.0.40
codegen_flags: <defaults>
</compile_context>

<pallas_src>
from functools import partial

import jax
import jax.numpy as jnp
from jax.experimental import pallas as pl
from jax.experimental.pallas import tpu as pltpu


def _round_up(v, m):
    return ((v + m - 1) // m) * m


def _emit_kernel(u_ref, c0_ref, xg_ref, out_ref, *, scale):
    # xg_ref: [2*in_dim, TE] edge tile (features on sublanes, edges on lanes),
    #         rows 0..in_dim-1 are x[src], rows in_dim..2*in_dim-1 are x[dst].
    # u_ref : [2*in_dim, 1] folded (Linear^T . BN . attention) weights, f32.
    # c0_ref: [1, 1] folded constant (beta terms minus mean corrections).
    xg = xg_ref[...].astype(jnp.float32)
    logit = jnp.sum(xg * u_ref[...], axis=0, keepdims=True) + c0_ref[...]  # [1, TE]
    ratio = jax.nn.sigmoid(logit)
    out_ref[...] = ratio * (1.0 - scale) + scale


def mixup_scale(x, src, dst, params, *, scale, eps=1e-5, tile_e=None,
                vmem_budget_bytes=16 * 1024 * 1024):
    """MixupScale forward.  x: [N, in_dim]; src/dst: [E] int node indices."""
    N, in_dim = x.shape
    E = src.shape[0]

    W = params["W"].astype(jnp.float32)               # [hid, in_dim] (PyTorch layout)
    hid = W.shape[0]
    gamma = params["gamma"].astype(jnp.float32)       # [hid]
    beta = params["beta"].astype(jnp.float32)         # [hid]
    att = params["att"].astype(jnp.float32).reshape(-1)   # [2*hid]
    a_s, a_d = att[:hid], att[hid:]

    xf = x.astype(jnp.float32)
    inv_e = 1.0 / float(E)

    # ---- BatchNorm batch statistics from node features + edge multiplicities.
    # Biased variance (divide by E), exactly as BatchNorm1d in training mode.
    # The Linear bias is dropped: BN subtracts the batch mean, so it cancels.
    def folded_u(idx, a_vec):
        counts = jnp.zeros((N,), jnp.float32).at[idx].add(1.0)       # edge multiplicity
        m = (counts @ xf) * inv_e                                    # [in_dim] edge-mean of x
        xc = xf - m                                                  # centered nodes
        gram = xc.T @ (xc * counts[:, None])                         # [in_dim, in_dim]
        var = jnp.sum((W @ gram) * W, axis=1) * inv_e                # [hid] biased var of h
        r = a_vec * gamma * jax.lax.rsqrt(var + eps)                 # [hid]
        u = W.T @ r                                                  # [in_dim]
        c = jnp.sum(a_vec * beta) - m @ u                            # scalar
        return u, c

    u_s, c_s = folded_u(src, a_s)
    u_d, c_d = folded_u(dst, a_d)
    u = jnp.concatenate([u_s, u_d]).reshape(2 * in_dim, 1)           # [2*in_dim, 1]
    c0 = (c_s + c_d).reshape(1, 1)                                   # [1, 1]

    # ---- Gather edge features in the source dtype, lane-major layout.
    # TODO(synk): fuse this row gather into the kernel via a manual DMA gather
    # with scalar-prefetched src/dst indices.
    xg = jnp.concatenate([x[src], x[dst]], axis=1).T                 # [2*in_dim, E]
    itemsize = jnp.dtype(xg.dtype).itemsize

    # ---- E-tile size from a VMEM budget (double-buffered input stream dominates).
    if tile_e is None:
        te = vmem_budget_bytes // (2 * 2 * in_dim * itemsize)
    else:
        te = int(tile_e)
    te = max(128, min(32768, (te // 128) * 128))
    TE = min(te, _round_up(E, 128))
    E_pad = _round_up(E, TE)
    num_tiles = E_pad // TE
    if E_pad != E:
        # Padded columns only affect padded outputs (sliced off below); they do
        # not touch the statistics, which come from node features above.
        xg = jnp.pad(xg, ((0, 0), (0, E_pad - E)))

    # Actual working set: double-buffered input tile + double-buffered output
    # tile + tiny resident u/c0.  Leave 2x headroom, cap for v7x (64 MiB VMEM).
    vmem_need = 2 * (2 * in_dim * TE * itemsize) + 2 * (TE * 4) + 4096
    vmem_limit = int(min(48 * 1024 * 1024, max(8 * 1024 * 1024, 2 * vmem_need)))

    out = pl.pallas_call(
        partial(_emit_kernel, scale=float(scale)),
        out_shape=jax.ShapeDtypeStruct((1, E_pad), jnp.float32),
        grid=(num_tiles,),
        in_specs=[
            pl.BlockSpec((2 * in_dim, 1), lambda t: (0, 0)),      # u   (resident)
            pl.BlockSpec((1, 1), lambda t: (0, 0)),               # c0  (resident)
            pl.BlockSpec((2 * in_dim, TE), lambda t: (0, t)),     # edge tile
        ],
        out_specs=pl.BlockSpec((1, TE), lambda t: (0, t)),        # lane-dense out
        compiler_params=pltpu.CompilerParams(
            # Single fully independent tile axis -> megacore-splittable on v7x.
            dimension_semantics=("parallel",),
            vmem_limit_bytes=vmem_limit,
        ),
    )(u, c0, xg)

    return out[0, :E].reshape(E, 1)


def mixup_scale_ref(x, src, dst, params, *, scale, eps=1e-5):
    """Pure-JAX reference (mirrors the PyTorch module, bias included)."""
    W, b = params["W"], params["b"]
    gamma, beta = params["gamma"], params["beta"]
    att_w = params["att"]

    def bn(h):
        mu = jnp.mean(h, axis=0, keepdims=True)
        var = jnp.mean((h - mu) ** 2, axis=0, keepdims=True)
        return (h - mu) / jnp.sqrt(var + eps) * gamma + beta

    hs = bn(x[src] @ W.T + b)
    hd = bn(x[dst] @ W.T + b)
    h = jnp.concatenate((hs, hd), axis=1)
    ratio = jax.nn.sigmoid(h @ att_w.T)
    return ratio * (1.0 - scale) + scale


if __name__ == "__main__":
    key = jax.random.PRNGKey(0)
    k1, k2, k3, k4, k5, k6, k7, k8 = jax.random.split(key, 8)

    # Small shapes consistent with the module: N nodes, E edges.
    N, in_dim, hid_dim, E = 64, 16, 32, 300
    scale = 0.5

    x = jax.random.normal(k1, (N, in_dim), jnp.float32)
    src = jax.random.randint(k2, (E,), 0, N)
    dst = jax.random.randint(k3, (E,), 0, N)

    params = {
        "W": jax.random.normal(k4, (hid_dim, in_dim), jnp.float32)
             * (1.0 / jnp.sqrt(in_dim)),
        "b": jax.random.normal(k5, (hid_dim,), jnp.float32) * 0.1,
        "att": jax.random.normal(k6, (1, 2 * hid_dim), jnp.float32)
               * (1.0 / jnp.sqrt(2 * hid_dim)),
        # BatchNorm1d affine params (perturbed so the affine path is exercised).
        "gamma": 1.0 + 0.1 * jax.random.normal(k7, (hid_dim,), jnp.float32),
        "beta": 0.1 * jax.random.normal(k8, (hid_dim,), jnp.float32),
    }

    ref = mixup_scale_ref(x, src, dst, params, scale=scale)

    # Default (auto tile, single tile at this E).
    out = mixup_scale(x, src, dst, params, scale=scale)
    jax.block_until_ready(out)
    assert out.shape == (E, 1)
    assert jnp.allclose(out, ref, atol=1e-4, rtol=1e-4), "mismatch (auto tile)"

    # Forced small tile to exercise the multi-tile / padded path.
    out_mt = mixup_scale(x, src, dst, params, scale=scale, tile_e=128)
    jax.block_until_ready(out_mt)
    assert jnp.allclose(out_mt, ref, atol=1e-4, rtol=1e-4), "mismatch (multi-tile)"

    # bf16 edge stream (kernel upcasts internally); looser tolerance for the
    # quantized inputs.
    out_bf = mixup_scale(x.astype(jnp.bfloat16), src, dst, params, scale=scale)
    jax.block_until_ready(out_bf)
    assert jnp.allclose(out_bf, ref, atol=2e-2, rtol=2e-2), "mismatch (bf16 stream)"

    print("KERNEL_OK")
</pallas_src>

<mosaic_0001>
module attributes {stable_mosaic.version = 11 : i64} {
  func.func @_emit_kernel(%arg0: i32, %arg1: memref<32x1xf32, #tpu.memory_space<vmem>>, %arg2: memref<1x1xf32, #tpu.memory_space<vmem>>, %arg3: memref<32x384xf32, #tpu.memory_space<vmem>>, %arg4: memref<1x384xf32, #tpu.memory_space<vmem>>) attributes {dimension_semantics = [#tpu.dimension_semantics<parallel>], iteration_bounds = array<i64: 1>, scalar_prefetch = 0 : i64, scratch_operands = 0 : i64, tpu.core_type = #tpu.core_type<tc>, window_params = [{pipeline_mode = #tpu.pipeline_mode<synchronous>, transform_indices = @transform_0, window_bounds = array<i64: 32, 1>}, {pipeline_mode = #tpu.pipeline_mode<synchronous>, transform_indices = @transform_1, window_bounds = array<i64: 1, 1>}, {transform_indices = @transform_2, window_bounds = array<i64: 32, 384>}, {transform_indices = @transform_3, window_bounds = array<i64: 1, 384>}]} {
    %c0 = arith.constant 0 : index
    %c0_0 = arith.constant 0 : index
    %0 = vector.load %arg3[%c0, %c0_0] : memref<32x384xf32, #tpu.memory_space<vmem>>, vector<32x384xf32>
    %c0_1 = arith.constant 0 : index
    %c0_2 = arith.constant 0 : index
    %1 = vector.load %arg1[%c0_1, %c0_2] : memref<32x1xf32, #tpu.memory_space<vmem>>, vector<32x1xf32>
    %2 = vector.broadcast %1 : vector<32x1xf32> to vector<32x384xf32>
    %3 = arith.mulf %0, %2 : vector<32x384xf32>
    %cst = arith.constant dense<0.000000e+00> : vector<384xf32>
    %4 = vector.multi_reduction <add>, %3, %cst [0] : vector<32x384xf32> to vector<384xf32>
    %5 = vector.shape_cast %4 : vector<384xf32> to vector<1x384xf32>
    %c0_3 = arith.constant 0 : index
    %c0_4 = arith.constant 0 : index
    %6 = vector.load %arg2[%c0_3, %c0_4] : memref<1x1xf32, #tpu.memory_space<vmem>>, vector<1x1xf32>
    %7 = vector.broadcast %6 : vector<1x1xf32> to vector<1x384xf32>
    %8 = arith.addf %5, %7 : vector<1x384xf32>
    %9 = arith.negf %8 : vector<1x384xf32>
    %10 = math.exp %9 : vector<1x384xf32>
    %cst_5 = arith.constant 1.000000e+00 : f32
    %11 = vector.broadcast %cst_5 : f32 to vector<1x384xf32>
    %12 = arith.addf %11, %10 : vector<1x384xf32>
    %13 = arith.divf %11, %12 : vector<1x384xf32>
    %cst_6 = arith.constant 5.000000e-01 : f32
    %14 = vector.broadcast %cst_6 : f32 to vector<1x384xf32>
    %15 = arith.mulf %13, %14 : vector<1x384xf32>
    %cst_7 = arith.constant 5.000000e-01 : f32
    %16 = vector.broadcast %cst_7 : f32 to vector<1x384xf32>
    %17 = arith.addf %15, %16 : vector<1x384xf32>
    %c0_8 = arith.constant 0 : index
    %c0_9 = arith.constant 0 : index
    %18 = vector.load %arg4[%c0_8, %c0_9] : memref<1x384xf32, #tpu.memory_space<vmem>>, vector<1x384xf32>
    tpu.vector_store %arg4[%c0_8, %c0_9], %17 {strides = array<i32>} : memref<1x384xf32, #tpu.memory_space<vmem>>, vector<1x384xf32>,
    return
  }
  func.func @transform_0(%arg0: i32) -> (i32, i32) {
    %c0_i32 = arith.constant 0 : i32
    %c0_i32_0 = arith.constant 0 : i32
    %c0_i32_1 = arith.constant 0 : i32
    return %c0_i32, %c0_i32_0 : i32, i32
  }
  func.func @transform_1(%arg0: i32) -> (i32, i32) {
    %c0_i32 = arith.constant 0 : i32
    %c0_i32_0 = arith.constant 0 : i32
    %c0_i32_1 = arith.constant 0 : i32
    return %c0_i32, %c0_i32_0 : i32, i32
  }
  func.func @transform_2(%arg0: i32) -> (i32, i32) {
    %c0_i32 = arith.constant 0 : i32
    %c0_i32_0 = arith.constant 0 : i32
    return %c0_i32, %arg0 : i32, i32
  }
  func.func @transform_3(%arg0: i32) -> (i32, i32) {
    %c0_i32 = arith.constant 0 : i32
    %c0_i32_0 = arith.constant 0 : i32
    return %c0_i32, %arg0 : i32, i32
  }
}

</mosaic_0001>

<llo_original>
// kernel: tpu_custom_call.1
$region0: #{tpu_custom_call.1}
  #allocation0 [shape = 'u32[]', space=smem, size = 0x4, offset = 0x4, fixed_abs, tag = 'smem constant byte address 0x4 - core index']
  #allocation1 [shape = 'u32[144,128]{1,0:T(1,128)}', space=vmem, size = 0x12000, scoped, tag = 'internal scratch']
  #allocation2 [shape = 'f32[1,1]{1,0:T(1,128)S(1)}', space=vmem, size = 0x200, scoped, tag = 'scoped memory for tpu_custom_call.1']
  %s0 = inlined_call_operand.vmem [shape: f32[32,1], index: 0, kind: input, shape index: {}]
  %s1 = inlined_call_operand.<no memory space> [shape: f32[1,1], index: 1, kind: input, shape index: {}]
  %s2 = inlined_call_operand.hbm [shape: f32[32,384], index: 2, kind: input, shape index: {}]
  %s3 = inlined_call_operand.hbm [shape: f32[1,384], index: 3, kind: output, shape index: {}]
  %s4 = sld [smem:[#allocation0]]
  $region26: #{tpu_custom_call.1} parent=0
    _
  %s6 = ssub.s32 1, %s4
  %s7 = scalar_select 0, %s6, %s4
  %v8 = vstv %s1
  %9 = vst [vmem:[#allocation2] sm:$0x1] %v8
  $region1: #{tpu_custom_call.1} parent=0
    #allocation3 [shape = 'u8[49152]{0}', space=vmem, size = 0xc000, scoped, tag = 'input window, operand 2, single buffered']
    #allocation4 [shape = 's32[1]{0}', space=sflag, size = 0x4, scoped, tag = 'scoped memory for tpu_custom_call.1']
    #allocation5 [shape = 's32[1]{0}', space=sflag, size = 0x4, scoped, tag = 'scoped memory for tpu_custom_call.1']
    #allocation6 [shape = 'u8[1536]{0}', space=vmem, size = 0x800, scoped, tag = 'output window, operand 0, single buffered']
    %10 = vsyncpa [#allocation4], 0
    %11 = vsyncpa [#allocation5], 0
    // Predicated region
    $region2: #{tpu_custom_call.1} parent=1 // pred_check
      _
    $region3: #{tpu_custom_call.1} parent=1 // pred_check_branch
      %13 = sbr.rel (0) target = $region5
    $region4: #{tpu_custom_call.1} parent=1 // pred_region
      _
    $region5: #{tpu_custom_call.1} parent=1 // pred_fallthru
      _
    // Predicated region
    $region6: #{tpu_custom_call.1} parent=1 // pred_check
      _
    $region7: #{tpu_custom_call.1} parent=1 // pred_check_branch
      %15 = sbr.rel (0) target = $region9
    $region8: #{tpu_custom_call.1} parent=1 // pred_region
      _
    $region9: #{tpu_custom_call.1} parent=1 // pred_fallthru
      _
    // Predicated region
    $region10: #{tpu_custom_call.1} parent=1 // pred_check
      _
    $region11: #{tpu_custom_call.1} parent=1 // pred_check_branch
      %17 = sbr.rel (0) target = $region13
    $region12: #{tpu_custom_call.1} parent=1 // pred_region
      %s19 = ssub.s32 1536, 1536
      %20 = vsyncadd [#allocation4], %s19
      %s21 = sshll.u32 [#allocation3], 4
      %s22 = int_to_ptr.vmem [resolvable:$true] %s21
      %27 = dma.hbm_to_vmem [thread:$0]  %s2, 1536, %s22, [#allocation4], 384, 384, 24
    $region13: #{tpu_custom_call.1} parent=1 // pred_fallthru
      _
    // Predicated region
    $region14: #{tpu_custom_call.1} parent=1 // pred_check
      _
    $region15: #{tpu_custom_call.1} parent=1 // pred_check_branch
      %29 = sbr.rel (0) target = $region17
    $region16: #{tpu_custom_call.1} parent=1 // pred_region
      %30 = dma.done [#allocation4], 1536
    $region17: #{tpu_custom_call.1} parent=1 // pred_fallthru
      _
    %v31 = vld [vmem:[#allocation3] sm:$0xff]
    %v32 = vld [vmem:[#allocation3 + $0x8] sm:$0xff]
    %v33 = vld [vmem:[#allocation3 + $0x10] sm:$0xff]
    %v34 = vld [vmem:[#allocation3 + $0x18] sm:$0xff]
    %v35 = vld [vmem:[#allocation3 + $0x20] sm:$0xff]
    %v36 = vld [vmem:[#allocation3 + $0x28] sm:$0xff]
    %v37 = vld [vmem:[#allocation3 + $0x30] sm:$0xff]
    %v38 = vld [vmem:[#allocation3 + $0x38] sm:$0xff]
    %v39 = vld [vmem:[#allocation3 + $0x40] sm:$0xff]
    %v40 = vld [vmem:[#allocation3 + $0x48] sm:$0xff]
    %v41 = vld [vmem:[#allocation3 + $0x50] sm:$0xff]
    %v42 = vld [vmem:[#allocation3 + $0x58] sm:$0xff]
    %v43 = vld [vmem:[%s0] sm:$0xff]
    %v44 = vld [vmem:[%s0 + $0x8] sm:$0xff]
    %v45 = vld [vmem:[%s0 + $0x10] sm:$0xff]
    %v46 = vld [vmem:[%s0 + $0x18] sm:$0xff]
    %48 = vset.pattern.permute.xlu0 0
    %49 = vperm.xlu0 %48, %v43
    %v50 = vpop.permute.xlu0 %49
    %53 = vset.pattern.permute.xlu0 0
    %54 = vperm.xlu0 %53, %v44
    %v55 = vpop.permute.xlu0 %54
    %58 = vset.pattern.permute.xlu0 0
    %59 = vperm.xlu0 %58, %v45
    %v60 = vpop.permute.xlu0 %59
    %63 = vset.pattern.permute.xlu0 0
    %64 = vperm.xlu0 %63, %v46
    %v65 = vpop.permute.xlu0 %64
    %v67 = vmul.f32 %v31, %v50
    %v68 = vmul.f32 %v32, %v50
    %v69 = vmul.f32 %v33, %v50
    %v70 = vmul.f32 %v34, %v55
    %v71 = vmul.f32 %v35, %v55
    %v72 = vmul.f32 %v36, %v55
    %v73 = vmul.f32 %v37, %v60
    %v74 = vmul.f32 %v38, %v60
    %v75 = vmul.f32 %v39, %v60
    %v76 = vmul.f32 %v40, %v65
    %v77 = vmul.f32 %v41, %v65
    %v78 = vmul.f32 %v42, %v65
    %v79 = vadd.f32 %v67, %v70
    %v80 = vadd.f32 %v79, %v73
    %v81 = vadd.f32 %v80, %v76
    %v82 = vrot.slane %v81, 4
    %v83 = vadd.f32 %v81, %v82
    %v84 = vrot.slane %v83, 2
    %v85 = vadd.f32 %v83, %v84
    %v86 = vrot.slane %v85, 1
    %v87 = vadd.f32 %v85, %v86
    %v88 = vadd.f32 %v68, %v71
    %v89 = vadd.f32 %v88, %v74
    %v90 = vadd.f32 %v89, %v77
    %v91 = vrot.slane %v90, 4
    %v92 = vadd.f32 %v90, %v91
    %v93 = vrot.slane %v92, 2
    %v94 = vadd.f32 %v92, %v93
    %v95 = vrot.slane %v94, 1
    %v96 = vadd.f32 %v94, %v95
    %v97 = vadd.f32 %v69, %v72
    %v98 = vadd.f32 %v97, %v75
    %v99 = vadd.f32 %v98, %v78
    %v100 = vrot.slane %v99, 4
    %v101 = vadd.f32 %v99, %v100
    %v102 = vrot.slane %v101, 2
    %v103 = vadd.f32 %v101, %v102
    %v104 = vrot.slane %v103, 1
    %v105 = vadd.f32 %v103, %v104
    %v106 = vld [vmem:[#allocation2] sm:$0x1]
    %108 = vset.pattern.permute.xlu0 0
    %109 = vperm.xlu0 %108, %v106
    %v110 = vpop.permute.xlu0 %109
    %v112 = vlaneseq
    %v113 = vshrl.u32 %v112, 7
    %v114 = vsub.s32 0, %v113
    %v115 = vrot.slane %v110, %v114
    %v116 = vadd.f32 %v87, %v115
    %v117 = vadd.f32 %v96, %v115
    %v118 = vadd.f32 %v105, %v115
    %v119 = vxor.u32 %v116, 2147483648
    %v120 = vxor.u32 %v117, 2147483648
    %v121 = vxor.u32 %v118, 2147483648
    %v122 = vmul.f32 %v119, 1.442695
    %v123 = vpow.pop %v122
    %v124 = vmul.f32 %v120, 1.442695
    %v125 = vpow.pop %v124
    %v126 = vmul.f32 %v121, 1.442695
    %v127 = vpow.pop %v126
    %v128 = vadd.f32 %v123, 1.0
    %v129 = vadd.f32 %v125, 1.0
    %v130 = vadd.f32 %v127, 1.0
    %v131 = vrcp.pop %v128
    %v132 = vmul.f32 1.0, %v131
    %v133 = vrcp.pop %v129
    %v134 = vmul.f32 1.0, %v133
    %v135 = vrcp.pop %v130
    %v136 = vmul.f32 1.0, %v135
    %v137 = vmul.f32 %v132, 0.5
    %v138 = vmul.f32 %v134, 0.5
    %v139 = vmul.f32 %v136, 0.5
    %v140 = vadd.f32 %v137, 0.5
    %v141 = vadd.f32 %v138, 0.5
    %v142 = vadd.f32 %v139, 0.5
    %v146 = vcombine.low %v140, %v141
    %v148 = vunpack.c.l.s4 1966171168
    %v149 = vunpack.c.0.s8 %v148
    %v150 = vlaneseq
    %v151 = vshrl.u32 %v150, 7
    %v152 = vsub.s32 %v149, %v151
    %v153 = vrot.slane %v146, %v152
    %v155 = vunpack.c.l.s4 1966171168
    %v156 = vunpack.c.0.s8 %v155
    %v157 = vlaneseq
    %v158 = vshrl.u32 %v157, 7
    %v159 = vsub.s32 %v156, %v158
    %v160 = vrot.slane %v142, %v159
    %v161 = vcombine.low %v153, %v160
    %v163 = vunpack.c.l.s4 1966171168
    %v164 = vunpack.c.0.s8 %v163
    %v165 = vlaneseq
    %v166 = vshrl.u32 %v165, 7
    %v167 = vsub.s32 %v164, %v166
    %v168 = vrot.slane %v161, %v167
    %v170 = vlaneseq
    %vm171 = vcmp.ge.s32.totalorder %v170, 0
    %vm172 = vcmp.lt.s32.totalorder %v170, 384
    %vm173 = vmand %vm171, %vm172
    %174 = vst.msk [vmem:[#allocation6] sm:$0x7] %vm173, %v168
    // Predicated region
    $region18: #{tpu_custom_call.1} parent=1 // pred_check
      _
    $region19: #{tpu_custom_call.1} parent=1 // pred_check_branch
      %176 = sbr.rel (0) target = $region21
    $region20: #{tpu_custom_call.1} parent=1 // pred_region
      %s178 = ssub.s32 48, 48
      %179 = vsyncadd [#allocation5], %s178
      %s181 = sshll.u32 [#allocation6], 4
      %s182 = int_to_ptr.vmem [resolvable:$true] %s181
      %184 = dma.vmem_to_hbm [thread:$0]  %s182, 48, %s3, [#allocation5]
    $region21: #{tpu_custom_call.1} parent=1 // pred_fallthru
      _
    // Predicated region
    $region22: #{tpu_custom_call.1} parent=1 // pred_check
      _
    $region23: #{tpu_custom_call.1} parent=1 // pred_check_branch
      %186 = sbr.rel (0) target = $region25
    $region24: #{tpu_custom_call.1} parent=1 // pred_region
      %187 = dma.done [#allocation5], 48
    $region25: #{tpu_custom_call.1} parent=1 // pred_fallthru
      _
    %188 = vsyncpa [#allocation4], 1
    %189 = vsyncpa [#allocation5], 1

</llo_original>
